<compile_context>
chip_gen: v7x
topology: tpu7x:2x2x1
jax: 0.10.0
libtpu: 0.0.40
codegen_flags: <defaults>
</compile_context>

<pallas_src>
import functools

import jax
import jax.numpy as jnp
from jax import lax
from jax.experimental import pallas as pl
from jax.experimental.pallas import tpu as pltpu


def _kl_div_kernel(s_ref, t_ref, o_ref, *, chunk_r, n_chunks, tile_r,
                   tiles_per_half, hw, needs_mask):
    """Accumulate per-pixel KL contributions for one (1, C, tile_r, 128) block."""

    @pl.when(pl.program_id(2) == 0)
    def _():
        o_ref[...] = jnp.zeros_like(o_ref)

    # Global row offset of this block (needed only for tail masking).
    block_row0 = (pl.program_id(1) * tiles_per_half + pl.program_id(2)) * tile_r

    def chunk_body(ci, carry):
        r = pl.multiple_of(ci * chunk_r, 8)
        s = s_ref[0, :, pl.ds(r, chunk_r), :].astype(jnp.float32)   # (C, chunk, 128)
        t = t_ref[0, :, pl.ds(r, chunk_r), :].astype(jnp.float32)   # (C, chunk, 128)

        # Teacher softmax pieces (unnormalized; one divide per pixel below).
        t_max = jnp.max(t, axis=0)                                  # (chunk, 128) VPU
        t_exp = jnp.exp(t - t_max[None])                            # (C, chunk, 128)
        t_sum = jnp.sum(t_exp, axis=0)                              # (chunk, 128)

        # Student log-softmax pieces.
        s_max = jnp.max(s, axis=0)
        s_shift = s - s_max[None]
        s_lse = jnp.log(jnp.sum(jnp.exp(s_shift), axis=0))          # (chunk, 128)

        # sum_c -softmax(t)_c * log_softmax(s)_c
        #   = s_lse - (sum_c t_exp_c * s_shift_c) / t_sum   (softmax(t) sums to 1)
        cross = jnp.sum(t_exp * s_shift, axis=0)
        # Exact divide on purpose: approx reciprocal saves <1% and risks the
        # 1e-5 loss tolerance.
        kl = s_lse - cross / t_sum                                  # (chunk, 128)

        if needs_mask:
            # Zero out rows/lanes past the true W*H extent (ragged tail / pad).
            row_ids = block_row0 + r + lax.broadcasted_iota(jnp.int32, kl.shape, 0)
            lane_ids = lax.broadcasted_iota(jnp.int32, kl.shape, 1)
            kl = jnp.where(row_ids * 128 + lane_ids < hw, kl, 0.0)

        o_ref[0, 0, pl.ds(r, chunk_r), :] += kl
        return carry

    if n_chunks == 1:
        chunk_body(0, 0)
    else:
        lax.fori_loop(0, n_chunks, chunk_body, 0, unroll=True)


def _round_down(x: int, m: int) -> int:
    return (x // m) * m


def kl_divergence_loss(preds_S: jax.Array, preds_T: jax.Array) -> jax.Array:
    """Pallas TPU implementation of KLDivergenceLoss.forward (NCHW inputs)."""
    assert preds_S.shape == preds_T.shape, \
        'the output dim of teacher and student differ'
    N, C, W, H = preds_S.shape
    HW = W * H
    itemsize = jnp.dtype(preds_S.dtype).itemsize
    sublane = {4: 8, 2: 16, 1: 32}.get(itemsize, 8)

    # --- Layout: NCHW -> (N, C, rows, 128).  Channel reductions become ops over
    # the leading axis (pure VPU); W*H is lane-dense on the last two axes. ---
    rows = pl.cdiv(HW, 128)
    hw_pad = rows * 128
    s3d = preds_S.reshape(N, C, HW)
    t3d = preds_T.reshape(N, C, HW)
    if hw_pad != HW:
        # TODO(synk): ragged W*H pays one pad copy here; a 3-D lane-masked kernel
        # would avoid the extra HBM traffic for that (rare) case.
        pad = ((0, 0), (0, 0), (0, hw_pad - HW))
        s3d = jnp.pad(s3d, pad)
        t3d = jnp.pad(t3d, pad)
    s4d = s3d.reshape(N, C, rows, 128)
    t4d = t3d.reshape(N, C, rows, 128)

    # --- Generation-aware sizing. ---
    try:
        vmem_cap = int(pltpu.get_tpu_info().vmem_capacity_bytes)
    except Exception:
        vmem_cap = 64 << 20   # conservative (v7x-sized) if the query is unavailable

    # Keep per-chunk f32 temporaries (~6 live copies of the upcast chain) <= ~2 MiB.
    chunk_cap = max(sublane, _round_down((2 << 20) // (6 * C * 128 * 4), sublane))
    # Per-input DMA block target: big enough to bury the ~0.35us per-step cost
    # (6-8 MiB depending on generation).
    target_block_bytes = min(8 << 20, vmem_cap // 10)

    if rows <= chunk_cap:
        tile_r, chunk_r, n_chunks = rows, rows, 1          # single full-extent block
    else:
        chunk_r = chunk_cap
        chunk_bytes = C * chunk_r * 128 * itemsize
        n_chunks = max(1, min(target_block_bytes // chunk_bytes,
                              rows // chunk_r, 32))
        tile_r = chunk_r * n_chunks
    row_tiles = pl.cdiv(rows, tile_r)
    needs_mask = (hw_pad != HW) or (rows % tile_r != 0)

    # Split row tiles into two "parallel" halves so v7x's 2 TensorCores stay busy
    # even for N == 1.  (Harmless on single-TC v5e/v6e.)
    halves = 2 if (row_tiles >= 2 and row_tiles % 2 == 0) else 1
    tiles_per_half = row_tiles // halves

    # --- Honest VMEM budget: 2 inputs x 2 pipeline buffers + resident output
    # (double-buffered) + f32 chunk intermediates + slack; cap at 3/4 physical. ---
    in_block_bytes = C * tile_r * 128 * itemsize
    out_block_bytes = tile_r * 128 * 4
    interm_bytes = 6 * C * chunk_r * 128 * 4
    vmem_limit = int(min(4 * in_block_bytes + 2 * out_block_bytes
                         + interm_bytes + (2 << 20),
                         (vmem_cap * 3) // 4))
    vmem_limit = max(vmem_limit, 16 << 20)

    kernel = functools.partial(
        _kl_div_kernel, chunk_r=chunk_r, n_chunks=n_chunks, tile_r=tile_r,
        tiles_per_half=tiles_per_half, hw=HW, needs_mask=needs_mask)

    def in_map(n, h, j):
        return (n, 0, h * tiles_per_half + j, 0)

    partials = pl.pallas_call(
        kernel,
        out_shape=jax.ShapeDtypeStruct((N, halves, tile_r, 128), jnp.float32),
        grid=(N, halves, tiles_per_half),
        in_specs=[
            pl.BlockSpec((1, C, tile_r, 128), in_map),
            pl.BlockSpec((1, C, tile_r, 128), in_map),
        ],
        out_specs=pl.BlockSpec((1, 1, tile_r, 128), lambda n, h, j: (n, h, 0, 0)),
        compiler_params=pltpu.CompilerParams(
            dimension_semantics=("parallel", "parallel", "arbitrary"),
            vmem_limit_bytes=vmem_limit),
    )(s4d, t4d)

    # Tiny final reduce of the lane-wise partial sums.
    return jnp.sum(partials) / W / H


def _reference(preds_S, preds_T):
    """Pure-JAX reference mirroring the PyTorch module."""
    N, C, W, H = preds_S.shape
    s2d = jnp.transpose(preds_S, (0, 2, 3, 1)).reshape(-1, C).astype(jnp.float32)
    t2d = jnp.transpose(preds_T, (0, 2, 3, 1)).reshape(-1, C).astype(jnp.float32)
    soft_t = jax.nn.softmax(t2d, axis=1)
    logsoft_s = jax.nn.log_softmax(s2d, axis=1)
    return jnp.sum(-soft_t * logsoft_s) / W / H


if __name__ == "__main__":
    key = jax.random.PRNGKey(0)
    k1, k2 = jax.random.split(key)
    N, C, W, H = 2, 4, 16, 16
    preds_S = jax.random.normal(k1, (N, C, W, H), dtype=jnp.float32)
    preds_T = jax.random.normal(k2, (N, C, W, H), dtype=jnp.float32)

    loss = jax.block_until_ready(kl_divergence_loss(preds_S, preds_T))
    ref = jax.block_until_ready(_reference(preds_S, preds_T))

    assert jnp.allclose(loss, ref, rtol=1e-5, atol=1e-5), (loss, ref)
    print("KERNEL_OK")
</pallas_src>

<mosaic_0001>
module attributes {stable_mosaic.version = 11 : i64} {
  func.func @_kl_div_kernel(%arg0: i32, %arg1: i32, %arg2: i32, %arg3: memref<1x4x2x128xf32, #tpu.memory_space<vmem>>, %arg4: memref<1x4x2x128xf32, #tpu.memory_space<vmem>>, %arg5: memref<1x1x2x128xf32, #tpu.memory_space<vmem>>) attributes {dimension_semantics = [#tpu.dimension_semantics<parallel>, #tpu.dimension_semantics<parallel>, #tpu.dimension_semantics<arbitrary>], iteration_bounds = array<i64: 2, 1, 1>, scalar_prefetch = 0 : i64, scratch_operands = 0 : i64, tpu.core_type = #tpu.core_type<tc>, window_params = [{transform_indices = @transform_0, window_bounds = array<i64: 1, 4, 2, 128>}, {transform_indices = @transform_1, window_bounds = array<i64: 1, 4, 2, 128>}, {transform_indices = @transform_2, window_bounds = array<i64: 1, 1, 2, 128>}]} {
    %c0_i32 = arith.constant 0 : i32
    %0 = arith.cmpi eq, %arg2, %c0_i32 : i32
    %1 = arith.extui %0 : i1 to i32
    %c0_i32_0 = arith.constant 0 : i32
    %2 = arith.cmpi ne, %1, %c0_i32_0 : i32
    scf.if %2 {
      %cst_17 = arith.constant 0.000000e+00 : f32
      %35 = vector.broadcast %cst_17 : f32 to vector<1x1x2x128xf32>
      %c0_18 = arith.constant 0 : index
      %c0_19 = arith.constant 0 : index
      %c0_20 = arith.constant 0 : index
      %c0_21 = arith.constant 0 : index
      %36 = vector.load %arg5[%c0_18, %c0_19, %c0_20, %c0_21] : memref<1x1x2x128xf32, #tpu.memory_space<vmem>>, vector<1x1x2x128xf32>
      tpu.vector_store %arg5[%c0_18, %c0_19, %c0_20, %c0_21], %35 {strides = array<i32>} : memref<1x1x2x128xf32, #tpu.memory_space<vmem>>, vector<1x1x2x128xf32>,
    } else {
    }
    %c0_i32_1 = arith.constant 0 : i32
    %3 = tpu.assume_multiple %c0_i32_1, 8 : i32
    %c0 = arith.constant 0 : index
    %c0_2 = arith.constant 0 : index
    %4 = arith.index_cast %3 : i32 to index
    %c0_3 = arith.constant 0 : index
    %5 = vector.load %arg3[%c0, %c0_2, %4, %c0_3] : memref<1x4x2x128xf32, #tpu.memory_space<vmem>>, vector<1x4x2x128xf32>
    %6 = vector.shape_cast %5 : vector<1x4x2x128xf32> to vector<4x2x128xf32>
    %c0_4 = arith.constant 0 : index
    %c0_5 = arith.constant 0 : index
    %7 = arith.index_cast %3 : i32 to index
    %c0_6 = arith.constant 0 : index
    %8 = vector.load %arg4[%c0_4, %c0_5, %7, %c0_6] : memref<1x4x2x128xf32, #tpu.memory_space<vmem>>, vector<1x4x2x128xf32>
    %9 = vector.shape_cast %8 : vector<1x4x2x128xf32> to vector<4x2x128xf32>
    %cst = arith.constant dense<0xFF800000> : vector<2x128xf32>
    %10 = vector.multi_reduction <maximumf>, %9, %cst [0] : vector<4x2x128xf32> to vector<2x128xf32>
    %11 = vector.shape_cast %10 : vector<2x128xf32> to vector<1x2x128xf32>
    %12 = vector.broadcast %11 : vector<1x2x128xf32> to vector<4x2x128xf32>
    %13 = arith.subf %9, %12 : vector<4x2x128xf32>
    %14 = math.exp %13 : vector<4x2x128xf32>
    %cst_7 = arith.constant dense<0.000000e+00> : vector<2x128xf32>
    %15 = vector.multi_reduction <add>, %14, %cst_7 [0] : vector<4x2x128xf32> to vector<2x128xf32>
    %cst_8 = arith.constant dense<0xFF800000> : vector<2x128xf32>
    %16 = vector.multi_reduction <maximumf>, %6, %cst_8 [0] : vector<4x2x128xf32> to vector<2x128xf32>
    %17 = vector.shape_cast %16 : vector<2x128xf32> to vector<1x2x128xf32>
    %18 = vector.broadcast %17 : vector<1x2x128xf32> to vector<4x2x128xf32>
    %19 = arith.subf %6, %18 : vector<4x2x128xf32>
    %20 = math.exp %19 : vector<4x2x128xf32>
    %cst_9 = arith.constant dense<0.000000e+00> : vector<2x128xf32>
    %21 = vector.multi_reduction <add>, %20, %cst_9 [0] : vector<4x2x128xf32> to vector<2x128xf32>
    %22 = math.log %21 : vector<2x128xf32>
    %23 = arith.mulf %14, %19 : vector<4x2x128xf32>
    %cst_10 = arith.constant dense<0.000000e+00> : vector<2x128xf32>
    %24 = vector.multi_reduction <add>, %23, %cst_10 [0] : vector<4x2x128xf32> to vector<2x128xf32>
    %25 = arith.divf %24, %15 : vector<2x128xf32>
    %26 = arith.subf %22, %25 : vector<2x128xf32>
    %c0_11 = arith.constant 0 : index
    %c0_12 = arith.constant 0 : index
    %27 = arith.index_cast %3 : i32 to index
    %c0_13 = arith.constant 0 : index
    %28 = vector.load %arg5[%c0_11, %c0_12, %27, %c0_13] : memref<1x1x2x128xf32, #tpu.memory_space<vmem>>, vector<1x1x2x128xf32>
    %29 = vector.shape_cast %28 : vector<1x1x2x128xf32> to vector<2x128xf32>
    %30 = arith.addf %29, %26 : vector<2x128xf32>
    %c0_14 = arith.constant 0 : index
    %c0_15 = arith.constant 0 : index
    %31 = arith.index_cast %3 : i32 to index
    %c0_16 = arith.constant 0 : index
    %32 = vector.load %arg5[%c0_14, %c0_15, %31, %c0_16] : memref<1x1x2x128xf32, #tpu.memory_space<vmem>>, vector<1x1x2x128xf32>
    %33 = vector.shape_cast %32 : vector<1x1x2x128xf32> to vector<2x128xf32>
    %34 = vector.shape_cast %30 : vector<2x128xf32> to vector<1x1x2x128xf32>
    tpu.vector_store %arg5[%c0_14, %c0_15, %31, %c0_16], %34 {strides = array<i32>} : memref<1x1x2x128xf32, #tpu.memory_space<vmem>>, vector<1x1x2x128xf32>,
    return
  }
  func.func @transform_0(%arg0: i32, %arg1: i32, %arg2: i32) -> (i32, i32, i32, i32) {
    %c1_i32 = arith.constant 1 : i32
    %0 = arith.muli %arg1, %c1_i32 : i32
    %1 = arith.addi %0, %arg2 : i32
    %c0_i32 = arith.constant 0 : i32
    %c0_i32_0 = arith.constant 0 : i32
    %c0_i32_1 = arith.constant 0 : i32
    return %arg0, %c0_i32, %1, %c0_i32_0 : i32, i32, i32, i32
  }
  func.func @transform_1(%arg0: i32, %arg1: i32, %arg2: i32) -> (i32, i32, i32, i32) {
    %c1_i32 = arith.constant 1 : i32
    %0 = arith.muli %arg1, %c1_i32 : i32
    %1 = arith.addi %0, %arg2 : i32
    %c0_i32 = arith.constant 0 : i32
    %c0_i32_0 = arith.constant 0 : i32
    %c0_i32_1 = arith.constant 0 : i32
    return %arg0, %c0_i32, %1, %c0_i32_0 : i32, i32, i32, i32
  }
  func.func @transform_2(%arg0: i32, %arg1: i32, %arg2: i32) -> (i32, i32, i32, i32) {
    %c0_i32 = arith.constant 0 : i32
    %c0_i32_0 = arith.constant 0 : i32
    %c0_i32_1 = arith.constant 0 : i32
    return %arg0, %arg1, %c0_i32, %c0_i32_0 : i32, i32, i32, i32
  }
}

</mosaic_0001>

<llo_original>
// kernel: tpu_custom_call.1
$region0: #{tpu_custom_call.1}
  #allocation0 [shape = 'u32[]', space=smem, size = 0x4, offset = 0x4, fixed_abs, tag = 'smem constant byte address 0x4 - core index']
  #allocation1 [shape = 'u32[144,128]{1,0:T(1,128)}', space=vmem, size = 0x12000, scoped, tag = 'internal scratch']
  %s0 = inlined_call_operand.hbm [shape: f32[2,4,2,128], index: 0, kind: input, shape index: {}]
  %s1 = inlined_call_operand.hbm [shape: f32[2,4,2,128], index: 1, kind: input, shape index: {}]
  %s2 = inlined_call_operand.hbm [shape: f32[2,1,2,128], index: 2, kind: output, shape index: {}]
  %s3 = sld [smem:[#allocation0]]
  $region53: #{tpu_custom_call.1} parent=0
    _
  %s5 = ssub.s32 1, %s3
  %s6 = scalar_select 0, %s5, %s3
  $region1: #{tpu_custom_call.1} parent=0
    #allocation2 [shape = 'u8[8192]{0}', space=vmem, size = 0x2000, scoped, tag = 'input window, operand 0']
    #allocation3 [shape = 's32[2]{0}', space=sflag, size = 0x8, scoped, tag = 'scoped memory for tpu_custom_call.1']
    #allocation4 [shape = 's32[2]{0}', space=sflag, size = 0x8, scoped, tag = 'scoped memory for tpu_custom_call.1']
    #allocation5 [shape = 'u8[8192]{0}', space=vmem, size = 0x2000, scoped, tag = 'input window, operand 1']
    #allocation6 [shape = 's32[2]{0}', space=sflag, size = 0x8, scoped, tag = 'scoped memory for tpu_custom_call.1']
    #allocation7 [shape = 'u8[2048]{0}', space=vmem, size = 0x800, scoped, tag = 'output window, operand 0']
    %7 = vsyncpa [#allocation3], 0
    %s8 = scalar_lea.sflag [#allocation3], 1
    %9 = vsyncpa %s8, 0
    %10 = vsyncpa [#allocation6], 0
    %s11 = scalar_lea.sflag [#allocation6], 1
    %12 = vsyncpa %s11, 0
    %13 = vsyncpa [#allocation4], 0
    %s14 = scalar_lea.sflag [#allocation4], 1
    %15 = vsyncpa %s14, 0
    loop: start=0, step=1, limit=4
    $region2: #{tpu_custom_call.1} parent=1 // loop_pre_header
      _
    $region3: #{tpu_custom_call.1} parent=1 // loop_header
      %s17 = sphi 0, %s21
      %p18 = scmp.ge.s32.totalorder %s17, 4
      %s24 = sphi 0, %s43
      %s25 = sphi 0, %s39
      %s26 = sphi 0, %s35
      %s27 = sphi 0, %s24
      %s28 = sphi 0, %s25
      %s29 = sphi 0, %s26
      %s30 = sphi 0, %s27
      %s31 = sphi 0, %s28
      %s32 = sphi 0, %s29
      %s50 = sphi 0, %s52
      %s53 = sphi 0, %s50
      %s54 = sphi 0, %s53
      %s70 = sphi 0, %s54
      %s80 = sphi 0, %s82
      %s83 = sphi 0, %s80
      %s84 = sphi 0, %s83
      %s100 = sphi 0, %s84
      %s108 = sphi 0, %s110
      %s111 = sphi 0, %s108
      %s112 = sphi 0, %s111
      %s128 = sphi 0, %s112
    $region4: #{tpu_custom_call.1} parent=1 // loop_header_branch
      %20 = sbr.rel (%p18) target = $region8
    $region5: #{tpu_custom_call.1} parent=1 // loop_body
      %s22 = ssub.s32 %s17, 1
      %s23 = ssub.s32 %s17, 2
      %s33 = sadd.s32 1, %s26
      %p34 = scmp.ge.s32.totalorder %s33, 1
      %s35 = scalar_select %p34, 0, %s33
      %s36 = sadd.s32 1, %s25
      %s37 = scalar_select %p34, %s36, %s25
      %p38 = scmp.ge.s32.totalorder %s37, 1
      %s39 = scalar_select %p38, 0, %s37
      %s40 = sadd.s32 1, %s24
      %s41 = scalar_select %p38, %s40, %s24
      %p42 = scmp.ge.s32.totalorder %s41, 2
      %s43 = scalar_select %p42, 0, %s41
      %s44 = sadd.s32 %s25, %s26
      %s45 = sadd.s32 %s39, %s35
      %s46 = ssub.s32 %s24, %s43
      %s47 = ssub.s32 %s44, %s45
      %s48 = sor.u32 %s46, %s47
      %p49 = scmp.eq.s32.totalorder %s48, 0
      %s51 = sadd.s32 %s50, 1
      %s52 = scalar_select %p49, %s50, %s51
      %p55 = pneg %p49
      %p56 = scmp.eq.s32.totalorder %s17, 1
      %p57 = por %p55, %p56
      %p58 = scmp.ne.s32.totalorder %s50, %s53
      %p59 = scmp.eq.s32.totalorder %s17, 0
      %p60 = por %p58, %p59
      %p61 = scmp.ne.s32.totalorder %s50, %s53
      %p62 = scmp.eq.s32.totalorder %s22, 1
      %p63 = por %p61, %p62
      %p64 = scmp.ne.s32.totalorder %s53, %s54
      %p65 = scmp.eq.s32.totalorder %s22, 0
      %p66 = por %p64, %p65
      %p67 = scmp.ne.s32.totalorder %s53, %s54
      %p68 = scmp.eq.s32.totalorder %s23, 1
      %p69 = por %p67, %p68
      %p71 = scmp.ne.s32.totalorder %s54, %s70
      %p72 = scmp.eq.s32.totalorder %s23, 0
      %p73 = por %p71, %p72
      %s74 = sadd.s32 %s25, %s26
      %s75 = sadd.s32 %s39, %s35
      %s76 = ssub.s32 %s24, %s43
      %s77 = ssub.s32 %s74, %s75
      %s78 = sor.u32 %s76, %s77
      %p79 = scmp.eq.s32.totalorder %s78, 0
      %s81 = sadd.s32 %s80, 1
      %s82 = scalar_select %p79, %s80, %s81
      %p85 = pneg %p79
      %p86 = scmp.eq.s32.totalorder %s17, 1
      %p87 = por %p85, %p86
      %p88 = scmp.ne.s32.totalorder %s80, %s83
      %p89 = scmp.eq.s32.totalorder %s17, 0
      %p90 = por %p88, %p89
      %p91 = scmp.ne.s32.totalorder %s80, %s83
      %p92 = scmp.eq.s32.totalorder %s22, 1
      %p93 = por %p91, %p92
      %p94 = scmp.ne.s32.totalorder %s83, %s84
      %p95 = scmp.eq.s32.totalorder %s22, 0
      %p96 = por %p94, %p95
      %p97 = scmp.ne.s32.totalorder %s83, %s84
      %p98 = scmp.eq.s32.totalorder %s23, 1
      %p99 = por %p97, %p98
      %p101 = scmp.ne.s32.totalorder %s84, %s100
      %p102 = scmp.eq.s32.totalorder %s23, 0
      %p103 = por %p101, %p102
      %s104 = ssub.s32 %s24, %s43
      %s105 = ssub.s32 %s25, %s39
      %s106 = sor.u32 %s104, %s105
      %p107 = scmp.eq.s32.totalorder %s106, 0
      %s109 = sadd.s32 %s108, 1
      %s110 = scalar_select %p107, %s108, %s109
      %p113 = pneg %p107
      %p114 = scmp.eq.s32.totalorder %s17, 1
      %p115 = por %p113, %p114
      %p116 = scmp.ne.s32.totalorder %s108, %s111
      %p117 = scmp.eq.s32.totalorder %s17, 0
      %p118 = por %p116, %p117
      %p119 = scmp.ne.s32.totalorder %s108, %s111
      %p120 = scmp.eq.s32.totalorder %s22, 1
      %p121 = por %p119, %p120
      %p122 = scmp.ne.s32.totalorder %s111, %s112
      %p123 = scmp.eq.s32.totalorder %s22, 0
      %p124 = por %p122, %p123
      %p125 = scmp.ne.s32.totalorder %s111, %s112
      %p126 = scmp.eq.s32.totalorder %s23, 1
      %p127 = por %p125, %p126
      %p129 = scmp.ne.s32.totalorder %s112, %s128
      %p130 = scmp.eq.s32.totalorder %s23, 0
      %p131 = por %p129, %p130
      %p132 = scmp.le.s32.totalorder 1, %s17
      %p133 = scmp.lt.s32.totalorder %s17, 3
      %p134 = pnand %p132, %p133
      %p135 = pneg %p134
      // Predicated region
      $region9: #{tpu_custom_call.1} parent=5 // pred_check
        _
      $region10: #{tpu_custom_call.1} parent=5 // pred_check_branch
        %137 = sbr.rel (%p134) target = $region12
      $region11: #{tpu_custom_call.1} parent=5 // pred_region
        %s138 = ssub.s32 %s17, 1
      $region12: #{tpu_custom_call.1} parent=5 // pred_fallthru
        _
      %p139 = scmp.lt.s32.totalorder %s17, 2
      // Predicated region
      $region13: #{tpu_custom_call.1} parent=5 // pred_check
        %p140 = pneg %p139
      $region14: #{tpu_custom_call.1} parent=5 // pred_check_branch
        %142 = sbr.rel (%p140) target = $region16
      $region15: #{tpu_custom_call.1} parent=5 // pred_region
        // Predicated region
        $region17: #{tpu_custom_call.1} parent=15 // pred_check
          %p143 = pneg %p60
        $region18: #{tpu_custom_call.1} parent=15 // pred_check_branch
          %145 = sbr.rel (%p143) target = $region20
        $region19: #{tpu_custom_call.1} parent=15 // pred_region
          %s146 = sand.u32 %s50, 1
          %s147 = scalar_lea.sflag [#allocation3], %s146
          %s148 = sand.u32 %s50, 1
          %s149 = smul.addr %s148, 8
          %s150 = scalar_lea.vmem [#allocation2], %s149
          %s151 = sadd.s32 %s25, %s26
          %s153 = ssub.s32 128, 128
          %154 = vsyncadd %s147, %s153
          %s155 = smul.addr %s24, 4
          %s156 = sadd.s32 %s151, %s155
          %s157 = smul.addr %s156, 32
          %s158 = scalar_lea.hbm %s0, %s157
          %s159 = sshll.u32 %s150, 4
          %s160 = int_to_ptr.vmem [resolvable:$true] %s159
          %165 = dma.hbm_to_vmem [thread:$0]  %s158, 128, %s160, %s147, 32, 32, 2
        $region20: #{tpu_custom_call.1} parent=15 // pred_fallthru
          _
        // Predicated region
        $region21: #{tpu_custom_call.1} parent=15 // pred_check
          %p166 = pneg %p90
        $region22: #{tpu_custom_call.1} parent=15 // pred_check_branch
          %168 = sbr.rel (%p166) target = $region24
        $region23: #{tpu_custom_call.1} parent=15 // pred_region
          %s169 = sand.u32 %s80, 1
          %s170 = scalar_lea.sflag [#allocation6], %s169
          %s171 = sand.u32 %s80, 1
          %s172 = smul.addr %s171, 8
          %s173 = scalar_lea.vmem [#allocation5], %s172
          %s174 = sadd.s32 %s25, %s26
          %s176 = ssub.s32 128, 128
          %177 = vsyncadd %s170, %s176
          %s178 = smul.addr %s24, 4
          %s179 = sadd.s32 %s174, %s178
          %s180 = smul.addr %s179, 32
          %s181 = scalar_lea.hbm %s1, %s180
          %s182 = sshll.u32 %s173, 4
          %s183 = int_to_ptr.vmem [resolvable:$true] %s182
          %188 = dma.hbm_to_vmem [thread:$0]  %s181, 128, %s183, %s170, 32, 32, 2
        $region24: #{tpu_custom_call.1} parent=15 // pred_fallthru
          _
      $region16: #{tpu_custom_call.1} parent=5 // pred_fallthru
        _
      %p189 = scmp.le.s32.totalorder 1, %s17
      %p190 = scmp.lt.s32.totalorder %s17, 3
      %p191 = pnand %p189, %p190
      %p192 = pneg %p191
      // Predicated region
      $region25: #{tpu_custom_call.1} parent=5 // pred_check
        _
      $region26: #{tpu_custom_call.1} parent=5 // pred_check_branch
        %194 = sbr.rel (%p191) target = $region28
      $region27: #{tpu_custom_call.1} parent=5 // pred_region
        %s195 = ssub.s32 %s17, 1
        %s196 = sand.u32 %s53, 1
        %s197 = scalar_lea.sflag [#allocation3], %s196
        %s198 = sand.u32 %s53, 1
        %s199 = smul.addr %s198, 8
        %s200 = scalar_lea.vmem [#allocation2], %s199
        // Predicated region
        $region29: #{tpu_custom_call.1} parent=27 // pred_check
          %p201 = pneg %p66
        $region30: #{tpu_custom_call.1} parent=27 // pred_check_branch
          %203 = sbr.rel (%p201) target = $region32
        $region31: #{tpu_custom_call.1} parent=27 // pred_region
          %204 = dma.done %s197, 128
        $region32: #{tpu_custom_call.1} parent=27 // pred_fallthru
          _
        %s205 = sand.u32 %s83, 1
        %s206 = scalar_lea.sflag [#allocation6], %s205
        %s207 = sand.u32 %s83, 1
        %s208 = smul.addr %s207, 8
        %s209 = scalar_lea.vmem [#allocation5], %s208
        // Predicated region
        $region33: #{tpu_custom_call.1} parent=27 // pred_check
          %p210 = pneg %p96
        $region34: #{tpu_custom_call.1} parent=27 // pred_check_branch
          %212 = sbr.rel (%p210) target = $region36
        $region35: #{tpu_custom_call.1} parent=27 // pred_region
          %213 = dma.done %s206, 128
        $region36: #{tpu_custom_call.1} parent=27 // pred_fallthru
          _
        %s214 = sand.u32 %s53, 1
        %s215 = scalar_lea.sflag [#allocation3], %s214
        %s216 = sand.u32 %s53, 1
        %s217 = smul.addr %s216, 8
        %s218 = scalar_lea.vmem [#allocation2], %s217
        %p219 = pneg %p66
        %p220 = pneg %p63
        %s221 = sand.u32 %s83, 1
        %s222 = scalar_lea.sflag [#allocation6], %s221
        %s223 = sand.u32 %s83, 1
        %s224 = smul.addr %s223, 8
        %s225 = scalar_lea.vmem [#allocation5], %s224
        %p226 = pneg %p96
        %p227 = pneg %p93
        %p228 = pneg %p124
        %p229 = pneg %p121
        %s230 = sand.u32 %s111, 1
        %s231 = scalar_lea.sflag [#allocation4], %s230
        %s232 = sand.u32 %s111, 1
        %s233 = smul.addr %s232, 2
        %s234 = scalar_lea.vmem [#allocation7], %s233
        %s235 = sadd.s32 %s28, %s29
        %s236 = sadd.s32 %s28, %s29
        %p237 = scmp.eq.s32.totalorder %s29, 0
        // Predicated region
        $region37: #{tpu_custom_call.1} parent=27 // pred_check
          %p238 = pneg %p237
        $region38: #{tpu_custom_call.1} parent=27 // pred_check_branch
          %240 = sbr.rel (%p238) target = $region40
        $region39: #{tpu_custom_call.1} parent=27 // pred_region
          %241 = vst [vmem:[%s234] sm:$0x3] 0.0
        $region40: #{tpu_custom_call.1} parent=27 // pred_fallthru
          _
        %v242 = vld [vmem:[%s200] sm:$0x3]
        %v243 = vld [vmem:[%s200 + $0x2] sm:$0x3]
        %v244 = vld [vmem:[%s200 + $0x4] sm:$0x3]
        %v245 = vld [vmem:[%s200 + $0x6] sm:$0x3]
        %v246 = vld [vmem:[%s209] sm:$0x3]
        %v247 = vld [vmem:[%s209 + $0x2] sm:$0x3]
        %v248 = vld [vmem:[%s209 + $0x4] sm:$0x3]
        %v249 = vld [vmem:[%s209 + $0x6] sm:$0x3]
        %vm250 = vcmask 1041408
        %v251 = vsel %vm250, %v246, -inf
        %v252 = vsel %vm250, %v247, -inf
        %v253 = vsel %vm250, %v248, -inf
        %v254 = vsel %vm250, %v249, -inf
        %v255 = vmax.f32 %v251, %v252
        %v256 = vmax.f32 %v253, %v254
        %v257 = vmax.f32 %v255, %v256
        %v258 = vsub.f32 %v246, %v257
        %v259 = vsub.f32 %v247, %v257
        %v260 = vsub.f32 %v248, %v257
        %v261 = vsub.f32 %v249, %v257
        %v262 = vmul.f32 %v258, 1.442695
        %v263 = vpow.pop %v262
        %v264 = vmul.f32 %v259, 1.442695
        %v265 = vpow.pop %v264
        %v266 = vmul.f32 %v260, 1.442695
        %v267 = vpow.pop %v266
        %v268 = vmul.f32 %v261, 1.442695
        %v269 = vpow.pop %v268
        %v270 = vsel %vm250, %v263, 0.0
        %v271 = vsel %vm250, %v265, 0.0
        %v272 = vadd.f32 %v270, %v271
        %v273 = vsel %vm250, %v267, 0.0
        %v274 = vadd.f32 %v272, %v273
        %v275 = vsel %vm250, %v269, 0.0
        %v276 = vadd.f32 %v274, %v275
        %v277 = vsel %vm250, %v242, -inf
        %v278 = vsel %vm250, %v243, -inf
        %v279 = vsel %vm250, %v244, -inf
        %v280 = vsel %vm250, %v245, -inf
        %v281 = vmax.f32 %v277, %v278
        %v282 = vmax.f32 %v279, %v280
        %v283 = vmax.f32 %v281, %v282
        %v284 = vsub.f32 %v242, %v283
        %v285 = vsub.f32 %v243, %v283
        %v286 = vsub.f32 %v244, %v283
        %v287 = vsub.f32 %v245, %v283
        %v288 = vmul.f32 %v284, 1.442695
        %v289 = vpow.pop %v288
        %v290 = vmul.f32 %v285, 1.442695
        %v291 = vpow.pop %v290
        %v292 = vmul.f32 %v286, 1.442695
        %v293 = vpow.pop %v292
        %v294 = vmul.f32 %v287, 1.442695
        %v295 = vpow.pop %v294
        %v296 = vsel %vm250, %v289, 0.0
        %v297 = vsel %vm250, %v291, 0.0
        %v298 = vadd.f32 %v296, %v297
        %v299 = vsel %vm250, %v293, 0.0
        %v300 = vadd.f32 %v298, %v299
        %v301 = vsel %vm250, %v295, 0.0
        %v302 = vadd.f32 %v300, %v301
        %v303 = vlog2.pop %v302
        %v304 = vmul.f32 %v303, 0.6931472
        %v305 = vmul.f32 %v263, %v284
        %v306 = vmul.f32 %v265, %v285
        %v307 = vmul.f32 %v267, %v286
        %v308 = vmul.f32 %v269, %v287
        %v309 = vsel %vm250, %v305, 0.0
        %v310 = vsel %vm250, %v306, 0.0
        %v311 = vadd.f32 %v309, %v310
        %v312 = vsel %vm250, %v307, 0.0
        %v313 = vadd.f32 %v311, %v312
        %v314 = vsel %vm250, %v308, 0.0
        %v315 = vadd.f32 %v313, %v314
        %v316 = vrcp.pop %v276
        %v317 = vmul.f32 %v315, %v316
        %v318 = vsub.f32 %v304, %v317
        %v319 = vld [vmem:[%s234] sm:$0x3]
        %v320 = vadd.f32 %v319, %v318
        %321 = vst [vmem:[%s234] sm:$0x3] %v320
        %s322 = sand.u32 %s111, 1
        %s323 = scalar_lea.sflag [#allocation4], %s322
        %s324 = sand.u32 %s111, 1
        %s325 = smul.addr %s324, 2
        %s326 = scalar_lea.vmem [#allocation7], %s325
        // Predicated region
        $region41: #{tpu_custom_call.1} parent=27 // pred_check
          %p327 = pneg %p121
        $region42: #{tpu_custom_call.1} parent=27 // pred_check_branch
          %329 = sbr.rel (%p327) target = $region44
        $region43: #{tpu_custom_call.1} parent=27 // pred_region
          %s331 = ssub.s32 32, 32
          %332 = vsyncadd %s323, %s331
          %s333 = sadd.s32 %s28, %s27
          %s334 = smul.addr %s333, 32
          %s335 = scalar_lea.hbm %s2, %s334
          %s337 = sshll.u32 %s326, 4
          %s338 = int_to_ptr.vmem [resolvable:$true] %s337
          %340 = dma.vmem_to_hbm [thread:$0]  %s338, 32, %s335, %s323
        $region44: #{tpu_custom_call.1} parent=27 // pred_fallthru
          _
      $region28: #{tpu_custom_call.1} parent=5 // pred_fallthru
        _
      %p341 = scmp.le.s32.totalorder 2, %s17
      // Predicated region
      $region45: #{tpu_custom_call.1} parent=5 // pred_check
        %p342 = pneg %p341
      $region46: #{tpu_custom_call.1} parent=5 // pred_check_branch
        %344 = sbr.rel (%p342) target = $region48
      $region47: #{tpu_custom_call.1} parent=5 // pred_region
        %s345 = ssub.s32 %s17, 2
        // Predicated region
        $region49: #{tpu_custom_call.1} parent=47 // pred_check
          %p346 = pneg %p127
        $region50: #{tpu_custom_call.1} parent=47 // pred_check_branch
          %348 = sbr.rel (%p346) target = $region52
        $region51: #{tpu_custom_call.1} parent=47 // pred_region
          %s349 = sand.u32 %s112, 1
          %s350 = scalar_lea.sflag [#allocation4], %s349
          %s351 = sand.u32 %s112, 1
          %s352 = smul.addr %s351, 2
          %s353 = scalar_lea.vmem [#allocation7], %s352
          %354 = dma.done %s350, 32
        $region52: #{tpu_custom_call.1} parent=47 // pred_fallthru
          _
      $region48: #{tpu_custom_call.1} parent=5 // pred_fallthru
        _
    $region6: #{tpu_custom_call.1} parent=1 // loop_footer
      %s21 = sadd.s32 1, %s17
    $region7: #{tpu_custom_call.1} parent=1 // loop_footer_branch
      %16 = sbr.rel target = $region3
    $region8: #{tpu_custom_call.1} parent=1 // loop_exit
      _
    %355 = vsyncpa [#allocation3], 1
    %s356 = scalar_lea.sflag [#allocation3], 1
    %357 = vsyncpa %s356, 1
    %358 = vsyncpa [#allocation6], 1
    %s359 = scalar_lea.sflag [#allocation6], 1
    %360 = vsyncpa %s359, 1
    %361 = vsyncpa [#allocation4], 1
    %s362 = scalar_lea.sflag [#allocation4], 1
    %363 = vsyncpa %s362, 1

</llo_original>
